<compile_context>
chip_gen: v5e
topology: v5e:2x2
jax: 0.10.0
libtpu: 0.0.40
codegen_flags: <defaults>
</compile_context>

<pallas_src>
import functools

import jax
import jax.numpy as jnp
from jax.experimental import pallas as pl
from jax.experimental.pallas import tpu as pltpu

LANE = 128
SUB = 16  # sublane multiple (bf16 packing; also satisfies f32's 8)


def _round_up(v, m):
    return ((v + m - 1) // m) * m


# ----------------------------------------------------------------------------
# Kernel bodies
# ----------------------------------------------------------------------------
def _sage_layer(a_tile, feat_tile, feat_full, w_self, w_neigh, bias, relu):
    """One SAGEConv(mean) layer for a tile of destination rows.

    a_tile:    (rt, N)  normalized in-adjacency rows for this dst tile
    feat_tile: (rt, F)  features of the dst rows (self term)
    feat_full: (N, F)   features of all source rows (neighbor term)
    """
    neigh = jnp.dot(a_tile, feat_full, preferred_element_type=jnp.float32)
    out = (jnp.dot(feat_tile, w_self, preferred_element_type=jnp.float32)
           + jnp.dot(neigh.astype(feat_full.dtype), w_neigh,
                     preferred_element_type=jnp.float32)
           + bias)
    if relu:
        out = jnp.maximum(out, 0.0)
    return out


def _gsq_small_kernel(x_ref, a_ref, w1s_ref, w1n_ref, b1_ref,
                      w2s_ref, w2n_ref, b2_ref, o_ref):
    """Whole graph fits in one tile: both layers fused in a single grid step."""
    x = x_ref[...]
    a = a_ref[...]
    h = _sage_layer(a, x, x, w1s_ref[...], w1n_ref[...], b1_ref[...], relu=True)
    h = h.astype(x.dtype)
    o_ref[...] = _sage_layer(a, h, h, w2s_ref[...], w2n_ref[...], b2_ref[...],
                             relu=False).astype(o_ref.dtype)


def _gsq_tiled_kernel(x_ref, a_ref, w1s_ref, w1n_ref, b1_ref,
                      w2s_ref, w2n_ref, b2_ref, o_ref, h_ref, *, a_resident):
    """grid = (phase, dst-row tile). Layer-1 output h stays resident in VMEM."""
    phase = pl.program_id(0)
    i = pl.program_id(1)
    rt = o_ref.shape[0]                       # dst-row tile size
    row0 = pl.multiple_of(i * rt, rt)         # fully aligned dynamic row offset

    # Anorm rows for this dst tile (sliced from the resident copy, or the
    # streamed (rt, N) block). Needed by both phases.
    a_tile = a_ref[pl.ds(row0, rt), :] if a_resident else a_ref[...]

    # ---- phase 0: layer 1 (mean aggregate + ReLU) for dst-row tile i ----
    # o_ref is intentionally NOT written here: its index_map pins phase 0 to
    # output block 0, which phase 1 (i=0) fully overwrites before the first
    # writeback, so no garbage and no redundant HBM traffic.
    @pl.when(phase == 0)
    def _():
        h = _sage_layer(a_tile, x_ref[pl.ds(row0, rt), :], x_ref[...],
                        w1s_ref[...], w1n_ref[...], b1_ref[...], relu=True)
        # NOTE: padded rows (>= n) evaluate to relu(b1); this is harmless ONLY
        # because the padded *columns* of Anorm are zero-filled, so padded rows
        # never contribute to the layer-2 aggregation. Keep that invariant.
        h_ref[pl.ds(row0, rt), :] = h.astype(h_ref.dtype)

    # ---- phase 1: layer 2 (mean aggregate, no activation) ----
    @pl.when(phase == 1)
    def _():
        o_ref[...] = _sage_layer(a_tile, h_ref[pl.ds(row0, rt), :], h_ref[...],
                                 w2s_ref[...], w2n_ref[...], b2_ref[...],
                                 relu=False).astype(o_ref.dtype)


# ----------------------------------------------------------------------------
# Wrapper
# ----------------------------------------------------------------------------
def gsq_forward(x, anorm, w1_self, w1_neigh, b1, w2_self, w2_neigh, b2,
                *, compute_dtype=jnp.bfloat16, row_tile=128):
    """2-layer GraphSAGE (mean) forward. anorm[dst, src] = 1/in_deg(dst) on edges."""
    n, f_in = x.shape
    hid = w1_self.shape[1]
    ncls = w2_self.shape[1]
    f32 = jnp.float32
    cdt = compute_dtype
    itemsize = jnp.dtype(cdt).itemsize

    fin_p = _round_up(f_in, LANE)
    hid_p = _round_up(hid, LANE)
    ncls_p = _round_up(ncls, LANE)
    # 128 matches the v5e MXU; 256 can help on v6e/v7x when n >= 256 and VMEM allows.
    rt = row_tile if n >= row_tile else _round_up(n, SUB)
    n_pad = _round_up(n, rt)
    n_tiles = n_pad // rt

    # Lane-dense, zero-padded operands. Zero padding keeps the math exact:
    # padded Anorm columns are zero, so padded source rows never feed aggregation.
    x_p = jnp.zeros((n_pad, fin_p), cdt).at[:n, :f_in].set(x.astype(cdt))
    a_p = jnp.zeros((n_pad, n_pad), cdt).at[:n, :n].set(anorm.astype(cdt))
    w1s_p = jnp.zeros((fin_p, hid_p), cdt).at[:f_in, :hid].set(w1_self.astype(cdt))
    w1n_p = jnp.zeros((fin_p, hid_p), cdt).at[:f_in, :hid].set(w1_neigh.astype(cdt))
    w2s_p = jnp.zeros((hid_p, ncls_p), cdt).at[:hid, :ncls].set(w2_self.astype(cdt))
    w2n_p = jnp.zeros((hid_p, ncls_p), cdt).at[:hid, :ncls].set(w2_neigh.astype(cdt))
    b1_p = jnp.zeros((1, hid_p), f32).at[:, :hid].set(b1.reshape(1, -1).astype(f32))
    b2_p = jnp.zeros((1, ncls_p), f32).at[:, :ncls].set(b2.reshape(1, -1).astype(f32))

    # Keep Anorm resident (single DMA) when it fits comfortably; otherwise
    # stream (rt, n_pad) row tiles per grid step (then it is fetched per phase).
    a_bytes = n_pad * n_pad * itemsize
    a_resident = a_bytes <= 16 * 1024 * 1024

    # VMEM budget: resident operands + double-buffered streams + h scratch,
    # clamped to 48 MiB so the limit stays v7x-safe (64 MiB physical per core).
    a_block_bytes = a_bytes if a_resident else rt * n_pad * itemsize
    resident_bytes = ((n_pad * fin_p + 2 * fin_p * hid_p + 2 * hid_p * ncls_p)
                      * itemsize + (hid_p + ncls_p) * 4)
    stream_bytes = a_block_bytes + rt * ncls_p * 4
    scratch_bytes = n_pad * hid_p * itemsize
    footprint = 2 * (resident_bytes + stream_bytes) + scratch_bytes
    vmem_limit = int(min(48 * 1024 * 1024,
                         max(16 * 1024 * 1024, footprint + 8 * 1024 * 1024)))

    args = (x_p, a_p, w1s_p, w1n_p, b1_p, w2s_p, w2n_p, b2_p)

    if n_tiles == 1:
        # Tiny graph: one grid step, both layers fused, no phase axis, no scratch.
        const1 = lambda shape: pl.BlockSpec(shape, lambda i: (0, 0))
        out_pad = pl.pallas_call(
            _gsq_small_kernel,
            out_shape=jax.ShapeDtypeStruct((n_pad, ncls_p), f32),
            grid_spec=pltpu.PrefetchScalarGridSpec(
                num_scalar_prefetch=0,
                grid=(1,),
                in_specs=[const1((n_pad, fin_p)), const1((n_pad, n_pad)),
                          const1((fin_p, hid_p)), const1((fin_p, hid_p)),
                          const1((1, hid_p)),
                          const1((hid_p, ncls_p)), const1((hid_p, ncls_p)),
                          const1((1, ncls_p))],
                out_specs=const1((n_pad, ncls_p)),
            ),
            compiler_params=pltpu.CompilerParams(
                dimension_semantics=("arbitrary",),
                vmem_limit_bytes=vmem_limit,
            ),
        )(*args)
        return out_pad[:n, :ncls]

    const = lambda shape: pl.BlockSpec(shape, lambda p, i: (0, 0))
    a_spec = (const((n_pad, n_pad)) if a_resident
              else pl.BlockSpec((rt, n_pad), lambda p, i: (i, 0)))

    out_pad = pl.pallas_call(
        functools.partial(_gsq_tiled_kernel, a_resident=a_resident),
        out_shape=jax.ShapeDtypeStruct((n_pad, ncls_p), f32),
        grid_spec=pltpu.PrefetchScalarGridSpec(
            num_scalar_prefetch=0,
            grid=(2, n_tiles),                       # (phase, dst-row tile)
            in_specs=[const((n_pad, fin_p)),         # x (resident)
                      a_spec,                        # Anorm (resident or row tiles)
                      const((fin_p, hid_p)),         # W1_self
                      const((fin_p, hid_p)),         # W1_neigh
                      const((1, hid_p)),             # b1 (f32)
                      const((hid_p, ncls_p)),        # W2_self
                      const((hid_p, ncls_p)),        # W2_neigh
                      const((1, ncls_p))],           # b2 (f32)
            # Phase 0 never writes o_ref; pinning it to block 0 during phase 0
            # means zero redundant writebacks (phase 1 overwrites block 0 first).
            out_specs=pl.BlockSpec((rt, ncls_p), lambda p, i: (p * i, 0)),
            scratch_shapes=[pltpu.VMEM((n_pad, hid_p), cdt)],  # persistent layer-1 h
        ),
        compiler_params=pltpu.CompilerParams(
            # Phase axis is a hard dependency; the row axis shares the
            # VMEM-resident h scratch so it must also stay on one TensorCore.
            # TODO(synk): on v7x, split the row axis over both TCs (h through an
            # HBM round-trip or VMEM_SHARED) for ~2x.
            dimension_semantics=("arbitrary", "arbitrary"),
            vmem_limit_bytes=vmem_limit,
        ),
    )(*args)
    return out_pad[:n, :ncls]


# ----------------------------------------------------------------------------
# Reference + test harness
# ----------------------------------------------------------------------------
def xavier_uniform(key, shape, gain=1.0):
    fan_in, fan_out = shape[0], shape[1]
    limit = gain * jnp.sqrt(6.0 / (fan_in + fan_out))
    return jax.random.uniform(key, shape, jnp.float32, -limit, limit)


def reference_forward(x, anorm, w1s, w1n, b1, w2s, w2n, b2):
    neigh1 = anorm @ x
    h = jnp.maximum(x @ w1s + neigh1 @ w1n + b1, 0.0)
    neigh2 = anorm @ h
    return h @ w2s + neigh2 @ w2n + b2


def _make_case(key, n, f_in, hid, ncls, p_edge=0.3):
    k_adj, k_x, k1, k2, k3, k4 = jax.random.split(key, 6)
    # Deterministic synthetic directed graph: A[src, dst] = 1 if edge src->dst.
    A = jax.random.bernoulli(k_adj, p=p_edge, shape=(n, n)).astype(jnp.float32)
    # Mean aggregation over in-edges: Anorm[dst, src] = 1/in_deg(dst) on edges,
    # zero rows for isolated destination nodes.
    in_deg = jnp.sum(A, axis=0)
    safe_deg = jnp.where(in_deg > 0, in_deg, 1.0)
    anorm = (A / safe_deg[None, :]).T
    x = jax.random.normal(k_x, (n, f_in), jnp.float32)
    relu_gain = jnp.sqrt(2.0)
    w1s = xavier_uniform(k1, (f_in, hid), gain=relu_gain)
    w1n = xavier_uniform(k2, (f_in, hid), gain=relu_gain)
    b1 = jnp.zeros((1, hid), jnp.float32)
    w2s = xavier_uniform(k3, (hid, ncls), gain=1.0)
    w2n = xavier_uniform(k4, (hid, ncls), gain=1.0)
    b2 = jnp.zeros((1, ncls), jnp.float32)
    return (x, anorm, w1s, w1n, b1, w2s, w2n, b2)


if __name__ == "__main__":
    key = jax.random.PRNGKey(0)
    k_small, k_big = jax.random.split(key)

    # Case 1: module-consistent small shapes (N=16, num_feature=16,
    # hidden_dim=32, num_class=8), f32 compute -> exact semantics check.
    args_small = _make_case(k_small, 16, 16, 32, 8)
    out_f32 = jax.block_until_ready(
        gsq_forward(*args_small, compute_dtype=jnp.float32))
    ref_small = reference_forward(*args_small)
    assert out_f32.shape == (16, 8)
    assert jnp.allclose(out_f32, ref_small, atol=1e-4, rtol=1e-4)

    # Case 2: same shapes, default bf16 compute path (relaxed tolerance).
    out_bf16 = jax.block_until_ready(gsq_forward(*args_small))
    assert jnp.allclose(out_bf16, ref_small, atol=5e-2, rtol=5e-2)

    # Case 3: larger graph exercising the 2-phase tiled grid + resident Anorm
    # + persistent VMEM h scratch (bf16 compute).
    args_big = _make_case(k_big, 300, 48, 64, 12)
    out_big = jax.block_until_ready(gsq_forward(*args_big))
    ref_big = reference_forward(*args_big)
    assert out_big.shape == (300, 12)
    assert jnp.allclose(out_big, ref_big, atol=5e-2, rtol=5e-2)

    print("KERNEL_OK")
</pallas_src>

<mosaic_0001>
module attributes {stable_mosaic.version = 11 : i64} {
  func.func @_gsq_small_kernel(%arg0: i32, %arg1: memref<16x128xf32, #tpu.memory_space<vmem>>, %arg2: memref<16x16xf32, #tpu.memory_space<vmem>>, %arg3: memref<128x128xf32, #tpu.memory_space<vmem>>, %arg4: memref<128x128xf32, #tpu.memory_space<vmem>>, %arg5: memref<1x128xf32, #tpu.memory_space<vmem>>, %arg6: memref<128x128xf32, #tpu.memory_space<vmem>>, %arg7: memref<128x128xf32, #tpu.memory_space<vmem>>, %arg8: memref<1x128xf32, #tpu.memory_space<vmem>>, %arg9: memref<16x128xf32, #tpu.memory_space<vmem>>) attributes {dimension_semantics = [#tpu.dimension_semantics<arbitrary>], iteration_bounds = array<i64: 1>, scalar_prefetch = 0 : i64, scratch_operands = 0 : i64, tpu.core_type = #tpu.core_type<tc>, window_params = [{pipeline_mode = #tpu.pipeline_mode<synchronous>, transform_indices = @transform_0, window_bounds = array<i64: 16, 128>}, {pipeline_mode = #tpu.pipeline_mode<synchronous>, transform_indices = @transform_1, window_bounds = array<i64: 16, 16>}, {pipeline_mode = #tpu.pipeline_mode<synchronous>, transform_indices = @transform_2, window_bounds = array<i64: 128, 128>}, {pipeline_mode = #tpu.pipeline_mode<synchronous>, transform_indices = @transform_3, window_bounds = array<i64: 128, 128>}, {pipeline_mode = #tpu.pipeline_mode<synchronous>, transform_indices = @transform_4, window_bounds = array<i64: 1, 128>}, {pipeline_mode = #tpu.pipeline_mode<synchronous>, transform_indices = @transform_5, window_bounds = array<i64: 128, 128>}, {pipeline_mode = #tpu.pipeline_mode<synchronous>, transform_indices = @transform_6, window_bounds = array<i64: 128, 128>}, {pipeline_mode = #tpu.pipeline_mode<synchronous>, transform_indices = @transform_7, window_bounds = array<i64: 1, 128>}, {pipeline_mode = #tpu.pipeline_mode<synchronous>, transform_indices = @transform_8, window_bounds = array<i64: 16, 128>}]} {
    %c0 = arith.constant 0 : index
    %c0_0 = arith.constant 0 : index
    %0 = vector.load %arg1[%c0, %c0_0] : memref<16x128xf32, #tpu.memory_space<vmem>>, vector<16x128xf32>
    %c0_1 = arith.constant 0 : index
    %c0_2 = arith.constant 0 : index
    %1 = vector.load %arg2[%c0_1, %c0_2] : memref<16x16xf32, #tpu.memory_space<vmem>>, vector<16x16xf32>
    %c0_3 = arith.constant 0 : index
    %c0_4 = arith.constant 0 : index
    %2 = vector.load %arg3[%c0_3, %c0_4] : memref<128x128xf32, #tpu.memory_space<vmem>>, vector<128x128xf32>
    %c0_5 = arith.constant 0 : index
    %c0_6 = arith.constant 0 : index
    %3 = vector.load %arg4[%c0_5, %c0_6] : memref<128x128xf32, #tpu.memory_space<vmem>>, vector<128x128xf32>
    %c0_7 = arith.constant 0 : index
    %c0_8 = arith.constant 0 : index
    %4 = vector.load %arg5[%c0_7, %c0_8] : memref<1x128xf32, #tpu.memory_space<vmem>>, vector<1x128xf32>
    %cst = arith.constant dense<0.000000e+00> : vector<16x128xf32>
    %5 = tpu.matmul %1, %0, %cst {dimension_numbers = #tpu.dot_dimension_numbers<[1], [0], [0], [1], [0, 0, 1, 1], [], []>} : vector<16x16xf32>, vector<16x128xf32>, vector<16x128xf32> -> vector<16x128xf32>
    %cst_9 = arith.constant dense<0.000000e+00> : vector<16x128xf32>
    %6 = tpu.matmul %0, %2, %cst_9 {dimension_numbers = #tpu.dot_dimension_numbers<[1], [0], [0], [1], [0, 0, 1, 1], [], []>} : vector<16x128xf32>, vector<128x128xf32>, vector<16x128xf32> -> vector<16x128xf32>
    %cst_10 = arith.constant dense<0.000000e+00> : vector<16x128xf32>
    %7 = tpu.matmul %5, %3, %cst_10 {dimension_numbers = #tpu.dot_dimension_numbers<[1], [0], [0], [1], [0, 0, 1, 1], [], []>} : vector<16x128xf32>, vector<128x128xf32>, vector<16x128xf32> -> vector<16x128xf32>
    %8 = arith.addf %6, %7 : vector<16x128xf32>
    %9 = vector.broadcast %4 : vector<1x128xf32> to vector<16x128xf32>
    %10 = arith.addf %8, %9 : vector<16x128xf32>
    %cst_11 = arith.constant 0.000000e+00 : f32
    %11 = vector.broadcast %cst_11 : f32 to vector<16x128xf32>
    %12 = arith.maximumf %10, %11 : vector<16x128xf32>
    %c0_12 = arith.constant 0 : index
    %c0_13 = arith.constant 0 : index
    %13 = vector.load %arg6[%c0_12, %c0_13] : memref<128x128xf32, #tpu.memory_space<vmem>>, vector<128x128xf32>
    %c0_14 = arith.constant 0 : index
    %c0_15 = arith.constant 0 : index
    %14 = vector.load %arg7[%c0_14, %c0_15] : memref<128x128xf32, #tpu.memory_space<vmem>>, vector<128x128xf32>
    %c0_16 = arith.constant 0 : index
    %c0_17 = arith.constant 0 : index
    %15 = vector.load %arg8[%c0_16, %c0_17] : memref<1x128xf32, #tpu.memory_space<vmem>>, vector<1x128xf32>
    %cst_18 = arith.constant dense<0.000000e+00> : vector<16x128xf32>
    %16 = tpu.matmul %1, %12, %cst_18 {dimension_numbers = #tpu.dot_dimension_numbers<[1], [0], [0], [1], [0, 0, 1, 1], [], []>} : vector<16x16xf32>, vector<16x128xf32>, vector<16x128xf32> -> vector<16x128xf32>
    %cst_19 = arith.constant dense<0.000000e+00> : vector<16x128xf32>
    %17 = tpu.matmul %12, %13, %cst_19 {dimension_numbers = #tpu.dot_dimension_numbers<[1], [0], [0], [1], [0, 0, 1, 1], [], []>} : vector<16x128xf32>, vector<128x128xf32>, vector<16x128xf32> -> vector<16x128xf32>
    %cst_20 = arith.constant dense<0.000000e+00> : vector<16x128xf32>
    %18 = tpu.matmul %16, %14, %cst_20 {dimension_numbers = #tpu.dot_dimension_numbers<[1], [0], [0], [1], [0, 0, 1, 1], [], []>} : vector<16x128xf32>, vector<128x128xf32>, vector<16x128xf32> -> vector<16x128xf32>
    %19 = arith.addf %17, %18 : vector<16x128xf32>
    %20 = vector.broadcast %15 : vector<1x128xf32> to vector<16x128xf32>
    %21 = arith.addf %19, %20 : vector<16x128xf32>
    %c0_21 = arith.constant 0 : index
    %c0_22 = arith.constant 0 : index
    %22 = vector.load %arg9[%c0_21, %c0_22] : memref<16x128xf32, #tpu.memory_space<vmem>>, vector<16x128xf32>
    tpu.vector_store %arg9[%c0_21, %c0_22], %21 {strides = array<i32>} : memref<16x128xf32, #tpu.memory_space<vmem>>, vector<16x128xf32>,
    return
  }
  func.func @transform_0(%arg0: i32) -> (i32, i32) {
    %c0_i32 = arith.constant 0 : i32
    %c0_i32_0 = arith.constant 0 : i32
    %c0_i32_1 = arith.constant 0 : i32
    return %c0_i32, %c0_i32_0 : i32, i32
  }
  func.func @transform_1(%arg0: i32) -> (i32, i32) {
    %c0_i32 = arith.constant 0 : i32
    %c0_i32_0 = arith.constant 0 : i32
    %c0_i32_1 = arith.constant 0 : i32
    return %c0_i32, %c0_i32_0 : i32, i32
  }
  func.func @transform_2(%arg0: i32) -> (i32, i32) {
    %c0_i32 = arith.constant 0 : i32
    %c0_i32_0 = arith.constant 0 : i32
    %c0_i32_1 = arith.constant 0 : i32
    return %c0_i32, %c0_i32_0 : i32, i32
  }
  func.func @transform_3(%arg0: i32) -> (i32, i32) {
    %c0_i32 = arith.constant 0 : i32
    %c0_i32_0 = arith.constant 0 : i32
    %c0_i32_1 = arith.constant 0 : i32
    return %c0_i32, %c0_i32_0 : i32, i32
  }
  func.func @transform_4(%arg0: i32) -> (i32, i32) {
    %c0_i32 = arith.constant 0 : i32
    %c0_i32_0 = arith.constant 0 : i32
    %c0_i32_1 = arith.constant 0 : i32
    return %c0_i32, %c0_i32_0 : i32, i32
  }
  func.func @transform_5(%arg0: i32) -> (i32, i32) {
    %c0_i32 = arith.constant 0 : i32
    %c0_i32_0 = arith.constant 0 : i32
    %c0_i32_1 = arith.constant 0 : i32
    return %c0_i32, %c0_i32_0 : i32, i32
  }
  func.func @transform_6(%arg0: i32) -> (i32, i32) {
    %c0_i32 = arith.constant 0 : i32
    %c0_i32_0 = arith.constant 0 : i32
    %c0_i32_1 = arith.constant 0 : i32
    return %c0_i32, %c0_i32_0 : i32, i32
  }
  func.func @transform_7(%arg0: i32) -> (i32, i32) {
    %c0_i32 = arith.constant 0 : i32
    %c0_i32_0 = arith.constant 0 : i32
    %c0_i32_1 = arith.constant 0 : i32
    return %c0_i32, %c0_i32_0 : i32, i32
  }
  func.func @transform_8(%arg0: i32) -> (i32, i32) {
    %c0_i32 = arith.constant 0 : i32
    %c0_i32_0 = arith.constant 0 : i32
    %c0_i32_1 = arith.constant 0 : i32
    return %c0_i32, %c0_i32_0 : i32, i32
  }
}

</mosaic_0001>

<llo_original>
// kernel: tpu_custom_call.1
$region0: #{tpu_custom_call.1}
  #allocation0 [shape = 'u32[]', space=smem, size = 0x4, offset = 0x4, fixed_abs, tag = 'smem constant byte address 0x4 - core index']
  #allocation1 [shape = 'u32[72,128]{1,0:T(1,128)}', space=vmem, size = 0x9000, scoped, tag = 'internal scratch']
  %s0 = inlined_call_operand.hbm [shape: f32[16,128], index: 0, kind: input, shape index: {}]
  %s1 = inlined_call_operand.hbm [shape: f32[16,16], index: 1, kind: input, shape index: {}]
  %s2 = inlined_call_operand.hbm [shape: f32[128,128], index: 2, kind: input, shape index: {}]
  %s3 = inlined_call_operand.hbm [shape: f32[128,128], index: 3, kind: input, shape index: {}]
  %s4 = inlined_call_operand.vmem [shape: f32[1,128], index: 4, kind: input, shape index: {}]
  %s5 = inlined_call_operand.hbm [shape: f32[128,128], index: 5, kind: input, shape index: {}]
  %s6 = inlined_call_operand.hbm [shape: f32[128,128], index: 6, kind: input, shape index: {}]
  %s7 = inlined_call_operand.vmem [shape: f32[1,128], index: 7, kind: input, shape index: {}]
  %s8 = inlined_call_operand.hbm [shape: f32[16,128], index: 8, kind: output, shape index: {}]
  %s9 = sld [smem:[#allocation0]]
  $region66: #{tpu_custom_call.1} parent=0
    _
  %s11 = ssub.s32 1, %s9
  %s12 = scalar_select 0, %s11, %s9
  $region1: #{tpu_custom_call.1} parent=0
    #allocation2 [shape = 'u8[8192]{0}', space=vmem, size = 0x2000, scoped, tag = 'input window, operand 0, single buffered']
    #allocation3 [shape = 's32[1]{0}', space=sflag, size = 0x4, scoped, tag = 'scoped memory for tpu_custom_call.1']
    #allocation4 [shape = 's32[1]{0}', space=sflag, size = 0x4, scoped, tag = 'scoped memory for tpu_custom_call.1']
    #allocation5 [shape = 'u8[8192]{0}', space=vmem, size = 0x2000, scoped, tag = 'input window, operand 1, single buffered']
    #allocation6 [shape = 's32[1]{0}', space=sflag, size = 0x4, scoped, tag = 'scoped memory for tpu_custom_call.1']
    #allocation7 [shape = 'u8[65536]{0}', space=vmem, size = 0x10000, scoped, tag = 'input window, operand 2, single buffered']
    #allocation8 [shape = 'u8[65536]{0}', space=vmem, size = 0x10000, scoped, tag = 'input window, operand 3, single buffered']
    #allocation9 [shape = 's32[1]{0}', space=sflag, size = 0x4, scoped, tag = 'scoped memory for tpu_custom_call.1']
    #allocation10 [shape = 'u8[65536]{0}', space=vmem, size = 0x10000, scoped, tag = 'input window, operand 5, single buffered']
    #allocation11 [shape = 'u8[65536]{0}', space=vmem, size = 0x10000, scoped, tag = 'input window, operand 6, single buffered']
    #allocation12 [shape = 's32[1]{0}', space=sflag, size = 0x4, scoped, tag = 'scoped memory for tpu_custom_call.1']
    #allocation13 [shape = 'u8[8192]{0}', space=vmem, size = 0x2000, scoped, tag = 'output window, operand 0, single buffered']
    %13 = vsyncpa [#allocation3], 0
    %14 = vsyncpa [#allocation6], 0
    %15 = vsyncpa [#allocation9], 0
    %16 = vsyncpa [#allocation12], 0
    %17 = vsyncpa [#allocation4], 0
    // Predicated region
    $region2: #{tpu_custom_call.1} parent=1 // pred_check
      _
    $region3: #{tpu_custom_call.1} parent=1 // pred_check_branch
      %19 = sbr.rel (0) target = $region5
    $region4: #{tpu_custom_call.1} parent=1 // pred_region
      %21 = vsyncadd [#allocation3], 0
      %s22 = sshll.u32 %s0, 4
      %s23 = int_to_ptr.hbm [resolvable:$true] %s22
      %s24 = sshll.u32 [#allocation2], 4
      %s25 = int_to_ptr.vmem [resolvable:$true] %s24
      %30 = dma.hbm_to_vmem [thread:$0]  %s23, 256, %s25, [#allocation3], 128, 128, 8
    $region5: #{tpu_custom_call.1} parent=1 // pred_fallthru
      _
    // Predicated region
    $region6: #{tpu_custom_call.1} parent=1 // pred_check
      _
    $region7: #{tpu_custom_call.1} parent=1 // pred_check_branch
      %32 = sbr.rel (0) target = $region9
    $region8: #{tpu_custom_call.1} parent=1 // pred_region
      %34 = vsyncadd [#allocation6], 0
      %s35 = sshll.u32 %s1, 4
      %s36 = int_to_ptr.hbm [resolvable:$true] %s35
      %s37 = sshll.u32 [#allocation5], 4
      %s38 = int_to_ptr.vmem [resolvable:$true] %s37
      %43 = dma.hbm_to_vmem [thread:$0]  %s36, 256, %s38, [#allocation6], 128, 128, 8
    $region9: #{tpu_custom_call.1} parent=1 // pred_fallthru
      _
    // Predicated region
    $region10: #{tpu_custom_call.1} parent=1 // pred_check
      _
    $region11: #{tpu_custom_call.1} parent=1 // pred_check_branch
      %45 = sbr.rel (0) target = $region13
    $region12: #{tpu_custom_call.1} parent=1 // pred_region
      %47 = vsyncadd [#allocation6], 0
      %s48 = sshll.u32 %s2, 4
      %s49 = int_to_ptr.hbm [resolvable:$true] %s48
      %s50 = sshll.u32 [#allocation7], 4
      %s51 = int_to_ptr.vmem [resolvable:$true] %s50
      %56 = dma.hbm_to_vmem [thread:$0]  %s49, 2048, %s51, [#allocation6], 128, 128, 8
    $region13: #{tpu_custom_call.1} parent=1 // pred_fallthru
      _
    // Predicated region
    $region14: #{tpu_custom_call.1} parent=1 // pred_check
      _
    $region15: #{tpu_custom_call.1} parent=1 // pred_check_branch
      %58 = sbr.rel (0) target = $region17
    $region16: #{tpu_custom_call.1} parent=1 // pred_region
      %60 = vsyncadd [#allocation9], 0
      %s61 = sshll.u32 %s3, 4
      %s62 = int_to_ptr.hbm [resolvable:$true] %s61
      %s63 = sshll.u32 [#allocation8], 4
      %s64 = int_to_ptr.vmem [resolvable:$true] %s63
      %69 = dma.hbm_to_vmem [thread:$0]  %s62, 2048, %s64, [#allocation9], 128, 128, 8
    $region17: #{tpu_custom_call.1} parent=1 // pred_fallthru
      _
    // Predicated region
    $region18: #{tpu_custom_call.1} parent=1 // pred_check
      _
    $region19: #{tpu_custom_call.1} parent=1 // pred_check_branch
      %71 = sbr.rel (0) target = $region21
    $region20: #{tpu_custom_call.1} parent=1 // pred_region
      _
    $region21: #{tpu_custom_call.1} parent=1 // pred_fallthru
      _
    // Predicated region
    $region22: #{tpu_custom_call.1} parent=1 // pred_check
      _
    $region23: #{tpu_custom_call.1} parent=1 // pred_check_branch
      %73 = sbr.rel (0) target = $region25
    $region24: #{tpu_custom_call.1} parent=1 // pred_region
      %75 = vsyncadd [#allocation9], 0
      %s76 = sshll.u32 %s5, 4
      %s77 = int_to_ptr.hbm [resolvable:$true] %s76
      %s78 = sshll.u32 [#allocation10], 4
      %s79 = int_to_ptr.vmem [resolvable:$true] %s78
      %84 = dma.hbm_to_vmem [thread:$0]  %s77, 2048, %s79, [#allocation9], 128, 128, 8
    $region25: #{tpu_custom_call.1} parent=1 // pred_fallthru
      _
    // Predicated region
    $region26: #{tpu_custom_call.1} parent=1 // pred_check
      _
    $region27: #{tpu_custom_call.1} parent=1 // pred_check_branch
      %86 = sbr.rel (0) target = $region29
    $region28: #{tpu_custom_call.1} parent=1 // pred_region
      %88 = vsyncadd [#allocation12], 0
      %s89 = sshll.u32 %s6, 4
      %s90 = int_to_ptr.hbm [resolvable:$true] %s89
      %s91 = sshll.u32 [#allocation11], 4
      %s92 = int_to_ptr.vmem [resolvable:$true] %s91
      %97 = dma.hbm_to_vmem [thread:$0]  %s90, 2048, %s92, [#allocation12], 128, 128, 8
    $region29: #{tpu_custom_call.1} parent=1 // pred_fallthru
      _
    // Predicated region
    $region30: #{tpu_custom_call.1} parent=1 // pred_check
      _
    $region31: #{tpu_custom_call.1} parent=1 // pred_check_branch
      %99 = sbr.rel (0) target = $region33
    $region32: #{tpu_custom_call.1} parent=1 // pred_region
      _
    $region33: #{tpu_custom_call.1} parent=1 // pred_fallthru
      _
    // Predicated region
    $region34: #{tpu_custom_call.1} parent=1 // pred_check
      _
    $region35: #{tpu_custom_call.1} parent=1 // pred_check_branch
      %101 = sbr.rel (0) target = $region37
    $region36: #{tpu_custom_call.1} parent=1 // pred_region
      %103 = dma.done [#allocation3], 256
    $region37: #{tpu_custom_call.1} parent=1 // pred_fallthru
      _
    // Predicated region
    $region38: #{tpu_custom_call.1} parent=1 // pred_check
      _
    $region39: #{tpu_custom_call.1} parent=1 // pred_check_branch
      %105 = sbr.rel (0) target = $region41
    $region40: #{tpu_custom_call.1} parent=1 // pred_region
      %107 = dma.done [#allocation6], 256
    $region41: #{tpu_custom_call.1} parent=1 // pred_fallthru
      _
    // Predicated region
    $region42: #{tpu_custom_call.1} parent=1 // pred_check
      _
    $region43: #{tpu_custom_call.1} parent=1 // pred_check_branch
      %109 = sbr.rel (0) target = $region45
    $region44: #{tpu_custom_call.1} parent=1 // pred_region
      %111 = dma.done [#allocation6], 2048
    $region45: #{tpu_custom_call.1} parent=1 // pred_fallthru
      _
    // Predicated region
    $region46: #{tpu_custom_call.1} parent=1 // pred_check
      _
    $region47: #{tpu_custom_call.1} parent=1 // pred_check_branch
      %113 = sbr.rel (0) target = $region49
    $region48: #{tpu_custom_call.1} parent=1 // pred_region
      %115 = dma.done [#allocation9], 2048
    $region49: #{tpu_custom_call.1} parent=1 // pred_fallthru
      _
    // Predicated region
    $region50: #{tpu_custom_call.1} parent=1 // pred_check
      _
    $region51: #{tpu_custom_call.1} parent=1 // pred_check_branch
      %117 = sbr.rel (0) target = $region53
    $region52: #{tpu_custom_call.1} parent=1 // pred_region
      %119 = dma.done [#allocation9], 2048
    $region53: #{tpu_custom_call.1} parent=1 // pred_fallthru
      _
    // Predicated region
    $region54: #{tpu_custom_call.1} parent=1 // pred_check
      _
    $region55: #{tpu_custom_call.1} parent=1 // pred_check_branch
      %121 = sbr.rel (0) target = $region57
    $region56: #{tpu_custom_call.1} parent=1 // pred_region
      %123 = dma.done [#allocation12], 2048
    $region57: #{tpu_custom_call.1} parent=1 // pred_fallthru
      _
    %v124 = vld [vmem:[#allocation2] sm:$0xff]
    %v125 = vld [vmem:[#allocation2 + $0x8] sm:$0xff]
    %v126 = vld [vmem:[#allocation5] sm:$0xff]
    %v127 = vld [vmem:[#allocation5 + $0x8] sm:$0xff]
    %v128 = vld [vmem:[#allocation7] sm:$0xff]
    %v129 = vld [vmem:[#allocation7 + $0x8] sm:$0xff]
    %v130 = vld [vmem:[#allocation7 + $0x10] sm:$0xff]
    %v131 = vld [vmem:[#allocation7 + $0x18] sm:$0xff]
    %v132 = vld [vmem:[#allocation7 + $0x20] sm:$0xff]
    %v133 = vld [vmem:[#allocation7 + $0x28] sm:$0xff]
    %v134 = vld [vmem:[#allocation7 + $0x30] sm:$0xff]
    %v135 = vld [vmem:[#allocation7 + $0x38] sm:$0xff]
    %v136 = vld [vmem:[#allocation7 + $0x40] sm:$0xff]
    %v137 = vld [vmem:[#allocation7 + $0x48] sm:$0xff]
    %v138 = vld [vmem:[#allocation7 + $0x50] sm:$0xff]
    %v139 = vld [vmem:[#allocation7 + $0x58] sm:$0xff]
    %v140 = vld [vmem:[#allocation7 + $0x60] sm:$0xff]
    %v141 = vld [vmem:[#allocation7 + $0x68] sm:$0xff]
    %v142 = vld [vmem:[#allocation7 + $0x70] sm:$0xff]
    %v143 = vld [vmem:[#allocation7 + $0x78] sm:$0xff]
    %v144 = vld [vmem:[#allocation8] sm:$0xff]
    %v145 = vld [vmem:[#allocation8 + $0x8] sm:$0xff]
    %v146 = vld [vmem:[#allocation8 + $0x10] sm:$0xff]
    %v147 = vld [vmem:[#allocation8 + $0x18] sm:$0xff]
    %v148 = vld [vmem:[#allocation8 + $0x20] sm:$0xff]
    %v149 = vld [vmem:[#allocation8 + $0x28] sm:$0xff]
    %v150 = vld [vmem:[#allocation8 + $0x30] sm:$0xff]
    %v151 = vld [vmem:[#allocation8 + $0x38] sm:$0xff]
    %v152 = vld [vmem:[#allocation8 + $0x40] sm:$0xff]
    %v153 = vld [vmem:[#allocation8 + $0x48] sm:$0xff]
    %v154 = vld [vmem:[#allocation8 + $0x50] sm:$0xff]
    %v155 = vld [vmem:[#allocation8 + $0x58] sm:$0xff]
    %v156 = vld [vmem:[#allocation8 + $0x60] sm:$0xff]
    %v157 = vld [vmem:[#allocation8 + $0x68] sm:$0xff]
    %v158 = vld [vmem:[#allocation8 + $0x70] sm:$0xff]
    %v159 = vld [vmem:[#allocation8 + $0x78] sm:$0xff]
    %v160 = vld [vmem:[%s4] sm:$0x1]
    %vm161 = vcmask 130048
    %v163 = vsel %vm161, %v126, 0
    %v166 = vsel %vm161, %v127, 0
    %168 = vmatpush.msra.mxu0 0.0
    %169 = vmatpush.msra.mxu0 0.0
    %170 = vmatpush.msra.mxu0 0.0
    %171 = vmatpush.msra.mxu0 0.0
    %172 = vmatpush.msra.mxu0 0.0
    %173 = vmatpush.msra.mxu0 0.0
    %174 = vmatpush.msra.mxu0 0.0
    %175 = vmatpush.msra.mxu0 0.0
    %176 = vmatpush.msra.mxu0 0.0
    %177 = vmatpush.msra.mxu0 0.0
    %178 = vmatpush.msra.mxu0 0.0
    %179 = vmatpush.msra.mxu0 0.0
    %180 = vmatpush.msra.mxu0 0.0
    %181 = vmatpush.msra.mxu0 0.0
    %182 = vmatpush.msra.mxu0 %v125
    %183 = vmatpush.msra.mxu0 %v124
    %184 = vmatmul.f32.gmra.mxu0 %v163
    %v185 = vpop.f32.mrf.mxu0
    %v186 = vadd.f32 0.0, %v185
    %187 = vmatmul.f32.gmra.mxu0 %v166
    %v188 = vpop.f32.mrf.mxu0
    %v189 = vadd.f32 0.0, %v188
    %190 = vdwg.mxu0
    %191 = vmatpush.msra.mxu0 %v159
    %192 = vmatpush.msra.mxu0 %v158
    %193 = vmatpush.msra.mxu0 %v157
    %194 = vmatpush.msra.mxu0 %v156
    %195 = vmatpush.msra.mxu0 %v155
    %196 = vmatpush.msra.mxu0 %v154
    %197 = vmatpush.msra.mxu0 %v153
    %198 = vmatpush.msra.mxu0 %v152
    %199 = vmatpush.msra.mxu0 %v151
    %200 = vmatpush.msra.mxu0 %v150
    %201 = vmatpush.msra.mxu0 %v149
    %202 = vmatpush.msra.mxu0 %v148
    %203 = vmatpush.msra.mxu0 %v147
    %204 = vmatpush.msra.mxu0 %v146
    %205 = vmatpush.msra.mxu0 %v145
    %206 = vmatpush.msra.mxu0 %v144
    %207 = vmatmul.f32.gmra.mxu0 %v186
    %v208 = vpop.f32.mrf.mxu0
    %v209 = vadd.f32 0.0, %v208
    %210 = vmatmul.f32.gmra.mxu0 %v189
    %v211 = vpop.f32.mrf.mxu0
    %v212 = vadd.f32 0.0, %v211
    %213 = vdwg.mxu0
    %214 = vmatpush.msra.mxu0 %v143
    %215 = vmatpush.msra.mxu0 %v142
    %216 = vmatpush.msra.mxu0 %v141
    %217 = vmatpush.msra.mxu0 %v140
    %218 = vmatpush.msra.mxu0 %v139
    %219 = vmatpush.msra.mxu0 %v138
    %220 = vmatpush.msra.mxu0 %v137
    %221 = vmatpush.msra.mxu0 %v136
    %222 = vmatpush.msra.mxu0 %v135
    %223 = vmatpush.msra.mxu0 %v134
    %224 = vmatpush.msra.mxu0 %v133
    %225 = vmatpush.msra.mxu0 %v132
    %226 = vmatpush.msra.mxu0 %v131
    %227 = vmatpush.msra.mxu0 %v130
    %228 = vmatpush.msra.mxu0 %v129
    %229 = vmatpush.msra.mxu0 %v128
    %230 = vmatmul.f32.gmra.mxu0 %v124
    %v231 = vpop.f32.mrf.mxu0
    %v232 = vadd.f32 %v209, %v231
    %233 = vmatmul.f32.gmra.mxu0 %v125
    %v234 = vpop.f32.mrf.mxu0
    %v235 = vadd.f32 %v212, %v234
    %236 = vdwg.mxu0
    %v238 = vperm.slane %v160, 0
    %v240 = vadd.f32 %v232, %v238
    %v241 = vadd.f32 %v235, %v238
    %v242 = vmax.f32 %v240, 0.0
    %v243 = vmax.f32 %v241, 0.0
    %v244 = vld [vmem:[#allocation10] sm:$0xff]
    %v245 = vld [vmem:[#allocation10 + $0x8] sm:$0xff]
    %v246 = vld [vmem:[#allocation10 + $0x10] sm:$0xff]
    %v247 = vld [vmem:[#allocation10 + $0x18] sm:$0xff]
    %v248 = vld [vmem:[#allocation10 + $0x20] sm:$0xff]
    %v249 = vld [vmem:[#allocation10 + $0x28] sm:$0xff]
    %v250 = vld [vmem:[#allocation10 + $0x30] sm:$0xff]
    %v251 = vld [vmem:[#allocation10 + $0x38] sm:$0xff]
    %v252 = vld [vmem:[#allocation10 + $0x40] sm:$0xff]
    %v253 = vld [vmem:[#allocation10 + $0x48] sm:$0xff]
    %v254 = vld [vmem:[#allocation10 + $0x50] sm:$0xff]
    %v255 = vld [vmem:[#allocation10 + $0x58] sm:$0xff]
    %v256 = vld [vmem:[#allocation10 + $0x60] sm:$0xff]
    %v257 = vld [vmem:[#allocation10 + $0x68] sm:$0xff]
    %v258 = vld [vmem:[#allocation10 + $0x70] sm:$0xff]
    %v259 = vld [vmem:[#allocation10 + $0x78] sm:$0xff]
    %v260 = vld [vmem:[#allocation11] sm:$0xff]
    %v261 = vld [vmem:[#allocation11 + $0x8] sm:$0xff]
    %v262 = vld [vmem:[#allocation11 + $0x10] sm:$0xff]
    %v263 = vld [vmem:[#allocation11 + $0x18] sm:$0xff]
    %v264 = vld [vmem:[#allocation11 + $0x20] sm:$0xff]
    %v265 = vld [vmem:[#allocation11 + $0x28] sm:$0xff]
    %v266 = vld [vmem:[#allocation11 + $0x30] sm:$0xff]
    %v267 = vld [vmem:[#allocation11 + $0x38] sm:$0xff]
    %v268 = vld [vmem:[#allocation11 + $0x40] sm:$0xff]
    %v269 = vld [vmem:[#allocation11 + $0x48] sm:$0xff]
    %v270 = vld [vmem:[#allocation11 + $0x50] sm:$0xff]
    %v271 = vld [vmem:[#allocation11 + $0x58] sm:$0xff]
    %v272 = vld [vmem:[#allocation11 + $0x60] sm:$0xff]
    %v273 = vld [vmem:[#allocation11 + $0x68] sm:$0xff]
    %v274 = vld [vmem:[#allocation11 + $0x70] sm:$0xff]
    %v275 = vld [vmem:[#allocation11 + $0x78] sm:$0xff]
    %v276 = vld [vmem:[%s7] sm:$0x1]
    %277 = vmatpush.msra.mxu0 0.0
    %278 = vmatpush.msra.mxu0 0.0
    %279 = vmatpush.msra.mxu0 0.0
    %280 = vmatpush.msra.mxu0 0.0
    %281 = vmatpush.msra.mxu0 0.0
    %282 = vmatpush.msra.mxu0 0.0
    %283 = vmatpush.msra.mxu0 0.0
    %284 = vmatpush.msra.mxu0 0.0
    %285 = vmatpush.msra.mxu0 0.0
    %286 = vmatpush.msra.mxu0 0.0
    %287 = vmatpush.msra.mxu0 0.0
    %288 = vmatpush.msra.mxu0 0.0
    %289 = vmatpush.msra.mxu0 0.0
    %290 = vmatpush.msra.mxu0 0.0
    %291 = vmatpush.msra.mxu0 %v243
    %292 = vmatpush.msra.mxu0 %v242
    %293 = vmatmul.f32.gmra.mxu0 %v163
    %v294 = vpop.f32.mrf.mxu0
    %v295 = vadd.f32 0.0, %v294
    %296 = vmatmul.f32.gmra.mxu0 %v166
    %v297 = vpop.f32.mrf.mxu0
    %v298 = vadd.f32 0.0, %v297
    %299 = vdwg.mxu0
    %300 = vmatpush.msra.mxu0 %v275
    %301 = vmatpush.msra.mxu0 %v274
    %302 = vmatpush.msra.mxu0 %v273
    %303 = vmatpush.msra.mxu0 %v272
    %304 = vmatpush.msra.mxu0 %v271
    %305 = vmatpush.msra.mxu0 %v270
    %306 = vmatpush.msra.mxu0 %v269
    %307 = vmatpush.msra.mxu0 %v268
    %308 = vmatpush.msra.mxu0 %v267
    %309 = vmatpush.msra.mxu0 %v266
    %310 = vmatpush.msra.mxu0 %v265
    %311 = vmatpush.msra.mxu0 %v264
    %312 = vmatpush.msra.mxu0 %v263
    %313 = vmatpush.msra.mxu0 %v262
    %314 = vmatpush.msra.mxu0 %v261
    %315 = vmatpush.msra.mxu0 %v260
    %316 = vmatmul.f32.gmra.mxu0 %v295
    %v317 = vpop.f32.mrf.mxu0
    %v318 = vadd.f32 0.0, %v317
    %319 = vmatmul.f32.gmra.mxu0 %v298
    %v320 = vpop.f32.mrf.mxu0
    %v321 = vadd.f32 0.0, %v320
    %322 = vdwg.mxu0
    %323 = vmatpush.msra.mxu0 %v259
    %324 = vmatpush.msra.mxu0 %v258
    %325 = vmatpush.msra.mxu0 %v257
    %326 = vmatpush.msra.mxu0 %v256
    %327 = vmatpush.msra.mxu0 %v255
    %328 = vmatpush.msra.mxu0 %v254
    %329 = vmatpush.msra.mxu0 %v253
    %330 = vmatpush.msra.mxu0 %v252
    %331 = vmatpush.msra.mxu0 %v251
    %332 = vmatpush.msra.mxu0 %v250
    %333 = vmatpush.msra.mxu0 %v249
    %334 = vmatpush.msra.mxu0 %v248
    %335 = vmatpush.msra.mxu0 %v247
    %336 = vmatpush.msra.mxu0 %v246
    %337 = vmatpush.msra.mxu0 %v245
    %338 = vmatpush.msra.mxu0 %v244
    %339 = vmatmul.f32.gmra.mxu0 %v242
    %v340 = vpop.f32.mrf.mxu0
    %v341 = vadd.f32 %v318, %v340
    %342 = vmatmul.f32.gmra.mxu0 %v243
    %v343 = vpop.f32.mrf.mxu0
    %v344 = vadd.f32 %v321, %v343
    %345 = vdwg.mxu0
    %v347 = vperm.slane %v276, 0
    %v349 = vadd.f32 %v341, %v347
    %v350 = vadd.f32 %v344, %v347
    %351 = vst [vmem:[#allocation13] sm:$0xff] %v349
    %352 = vst [vmem:[#allocation13 + $0x8] sm:$0xff] %v350
    // Predicated region
    $region58: #{tpu_custom_call.1} parent=1 // pred_check
      _
    $region59: #{tpu_custom_call.1} parent=1 // pred_check_branch
      %354 = sbr.rel (0) target = $region61
    $region60: #{tpu_custom_call.1} parent=1 // pred_region
      %356 = vsyncadd [#allocation4], 0
      %s357 = sshll.u32 [#allocation13], 4
      %s358 = int_to_ptr.vmem [resolvable:$true] %s357
      %s359 = sshll.u32 %s8, 4
      %s360 = int_to_ptr.hbm [resolvable:$true] %s359
      %365 = dma.vmem_to_hbm [thread:$0]  %s358, 256, %s360, [#allocation4], 128, 128, 8
    $region61: #{tpu_custom_call.1} parent=1 // pred_fallthru
      _
    // Predicated region
    $region62: #{tpu_custom_call.1} parent=1 // pred_check
      _
    $region63: #{tpu_custom_call.1} parent=1 // pred_check_branch
      %367 = sbr.rel (0) target = $region65
    $region64: #{tpu_custom_call.1} parent=1 // pred_region
      %369 = dma.done [#allocation4], 256
    $region65: #{tpu_custom_call.1} parent=1 // pred_fallthru
      _
    %370 = vsyncpa [#allocation3], 1
    %371 = vsyncpa [#allocation6], 1
    %372 = vsyncpa [#allocation9], 1
    %373 = vsyncpa [#allocation12], 1
    %374 = vsyncpa [#allocation4], 1

</llo_original>
